<compile_context>
chip_gen: v6e
topology: v6e:2x2x1
jax: 0.10.0
libtpu: 0.0.40
codegen_flags: <defaults>
</compile_context>

<pallas_src>
import functools
import math

import jax
import jax.numpy as jnp
from jax.experimental import pallas as pl
from jax.experimental.pallas import tpu as pltpu

LOG_STD_MAX = 2.0
LOG_STD_MIN = -20.0
_HALF_LOG_2PI = 0.5 * math.log(2.0 * math.pi)


def _pick_tile_b(batch):
    """Batch tile: <=1024 rows, prefer >=2 grid programs (v7x megacore)."""
    for t in (1024, 512, 256, 128, 64, 32, 16, 8):
        if batch % t == 0 and batch // t >= 2:
            return t
    for t in (1024, 512, 256, 128, 64, 32, 16, 8):
        if batch % t == 0:
            return t
    return batch  # odd batch: single full-array block (block dim == array dim)


def _policy_kernel(obs_ref, eps_ref, w1_ref, b1_ref, wh_ref, bh_ref,
                   act_ref, logp_ref, *, act_dim):
    f32 = jnp.float32

    # --- logits_net: Linear1 -> Tanh (Linear2 is folded into the heads) ----
    h = jnp.tanh(
        jnp.dot(obs_ref[...], w1_ref[...], preferred_element_type=f32)
        + b1_ref[...]
    )                                                        # [tb, h1] f32

    # --- fused (Linear2 @ [W_mu | W_ls]) head: one narrow MXU matmul --------
    heads = (
        jnp.dot(h, wh_ref[...], preferred_element_type=f32)
        + bh_ref[...]
    )                                                        # [tb, 2*act_dim]
    mu = jnp.tanh(heads[:, :act_dim])                        # [tb, act_dim]
    log_sigma = jnp.clip(heads[:, act_dim:], LOG_STD_MIN, LOG_STD_MAX)
    sigma = jnp.tanh(jnp.exp(log_sigma))                     # [tb, act_dim]

    # --- reparameterized sample (lane-exact: no padding lanes) --------------
    eps = eps_ref[...]                                       # [tb, act_dim]
    act_ref[...] = mu + sigma * eps

    # --- log-prob: z = (action - mu)/sigma == eps exactly -------------------
    logp_terms = -0.5 * (eps * eps) - jnp.log(sigma) - _HALF_LOG_2PI
    row_logp = jnp.sum(logp_terms, axis=-1, keepdims=True)   # [tb, 1]
    logp_ref[...] = jnp.sum(row_logp, axis=0, keepdims=True)  # [1, 1] partial


def diagonal_gaussian_mlp_policy(obs, eps, params, *, tile_b=None):
    """Returns (action [B, act_dim], log_prob_sum scalar)."""
    obs = jnp.asarray(obs, jnp.float32)
    eps = jnp.asarray(eps, jnp.float32)
    B, obs_dim = obs.shape
    w1, b1 = params["w1"], params["b1"].reshape(1, -1)
    w2, b2 = params["w2"], params["b2"].reshape(1, -1)
    wmu, wls = params["wmu"], params["wls"]
    h1 = w1.shape[1]
    act_dim = wmu.shape[1]

    # Fold Linear2 into the bias-free heads (no nonlinearity between them):
    #   h_mu  = tanh(L1) @ w2 + b2
    #   heads = h_mu @ [wmu | wls] = tanh(L1) @ (w2 @ Wh) + (b2 @ Wh)
    w_heads = jnp.concatenate([wmu, wls], axis=1)            # [h2, 2*act_dim]
    w2h = (w2 @ w_heads).astype(jnp.float32)                  # [h1, 2*act_dim]
    b2h = (b2 @ w_heads).astype(jnp.float32)                  # [1, 2*act_dim]

    tb = tile_b if tile_b is not None else _pick_tile_b(B)
    if B % tb != 0:
        tb = B
    num_tiles = B // tb
    grid = (num_tiles,)

    cost = pl.CostEstimate(
        flops=2 * B * (obs_dim * h1 + h1 * 2 * act_dim) + 10 * B * act_dim,
        transcendentals=B * (h1 + 4 * act_dim),
        bytes_accessed=4 * (int(obs.size) + int(eps.size) + B * act_dim
                            + num_tiles + int(w1.size) + int(b1.size)
                            + int(w2h.size) + int(b2h.size)),
    )

    action, logp_partials = pl.pallas_call(
        functools.partial(_policy_kernel, act_dim=act_dim),
        out_shape=(
            jax.ShapeDtypeStruct((B, act_dim), jnp.float32),
            jax.ShapeDtypeStruct((num_tiles, 1), jnp.float32),
        ),
        grid=grid,
        in_specs=[
            pl.BlockSpec((tb, obs_dim), lambda i: (i, 0)),        # obs (tiled)
            pl.BlockSpec((tb, act_dim), lambda i: (i, 0)),        # eps (tiled)
            pl.BlockSpec((obs_dim, h1), lambda i: (0, 0)),        # weights stay
            pl.BlockSpec((1, h1), lambda i: (0, 0)),              #  VMEM-resident
            pl.BlockSpec((h1, 2 * act_dim), lambda i: (0, 0)),
            pl.BlockSpec((1, 2 * act_dim), lambda i: (0, 0)),
        ],
        out_specs=(
            pl.BlockSpec((tb, act_dim), lambda i: (i, 0)),        # action
            pl.BlockSpec((1, 1), lambda i: (i, 0)),               # logp partial
        ),
        compiler_params=pltpu.CompilerParams(
            dimension_semantics=("parallel",),
            vmem_limit_bytes=32 * 1024 * 1024),
        cost_estimate=cost,
    )(obs, eps, w1, b1, w2h, b2h)

    return action, jnp.sum(logp_partials)


def init_params(key, sizes):
    """Matches the PyTorch init: uniform(-1/sqrt(size(-1)), 1/sqrt(size(-1)))."""
    obs_dim, h1, h2, act_dim = sizes
    ks = jax.random.split(key, 6)

    def unif(k, shape, fan):
        stdv = 1.0 / math.sqrt(fan)
        return jax.random.uniform(k, shape, jnp.float32, -stdv, stdv)

    # Weights stored pre-transposed as [in, out]; PyTorch stdv uses size(-1).
    return {
        "w1": unif(ks[0], (obs_dim, h1), obs_dim),
        "b1": unif(ks[1], (1, h1), h1),
        "w2": unif(ks[2], (h1, h2), h1),
        "b2": unif(ks[3], (1, h2), h2),
        "wmu": unif(ks[4], (h2, act_dim), h2),
        "wls": unif(ks[5], (h2, act_dim), h2),
    }


def _reference(obs, eps, p):
    h1 = jnp.tanh(obs @ p["w1"] + p["b1"])
    h_mu = h1 @ p["w2"] + p["b2"]
    mu = jnp.tanh(h_mu @ p["wmu"])
    log_sigma = jnp.clip(h_mu @ p["wls"], LOG_STD_MIN, LOG_STD_MAX)
    sigma = jnp.tanh(jnp.exp(log_sigma))
    action = mu + sigma * eps
    z = (action - mu) / sigma          # PyTorch Normal.log_prob formulation
    logp = jnp.sum(-0.5 * z * z - jnp.log(sigma) - _HALF_LOG_2PI)
    return action, logp


if __name__ == "__main__":
    sizes = [16, 32, 32, 8]            # [obs_dim, hidden1, hidden2, act_dim]
    batch = 8

    key = jax.random.PRNGKey(0)
    k_param, k_obs, k_eps = jax.random.split(key, 3)

    params = init_params(k_param, sizes)
    obs = jax.random.normal(k_obs, (batch, sizes[0]), dtype=jnp.float32)
    eps = jax.random.normal(k_eps, (batch, sizes[-1]), dtype=jnp.float32)

    action, logp = diagonal_gaussian_mlp_policy(obs, eps, params)
    jax.block_until_ready((action, logp))

    ref_action, ref_logp = _reference(obs, eps, params)
    assert jnp.allclose(action, ref_action, atol=1e-5, rtol=1e-5), "action mismatch"
    assert jnp.allclose(logp, ref_logp, atol=1e-4, rtol=1e-5), "logp mismatch"

    print("KERNEL_OK")
</pallas_src>

<mosaic_0001>
module attributes {stable_mosaic.version = 11 : i64} {
  func.func @_policy_kernel(%arg0: i32, %arg1: memref<8x16xf32, #tpu.memory_space<vmem>>, %arg2: memref<8x8xf32, #tpu.memory_space<vmem>>, %arg3: memref<16x32xf32, #tpu.memory_space<vmem>>, %arg4: memref<1x32xf32, #tpu.memory_space<vmem>>, %arg5: memref<32x16xf32, #tpu.memory_space<vmem>>, %arg6: memref<1x16xf32, #tpu.memory_space<vmem>>, %arg7: memref<8x8xf32, #tpu.memory_space<vmem>>, %arg8: memref<1x1xf32, #tpu.memory_space<vmem>>) attributes {dimension_semantics = [#tpu.dimension_semantics<parallel>], iteration_bounds = array<i64: 1>, scalar_prefetch = 0 : i64, scratch_operands = 0 : i64, tpu.core_type = #tpu.core_type<tc>, window_params = [{transform_indices = @transform_0, window_bounds = array<i64: 8, 16>}, {transform_indices = @transform_1, window_bounds = array<i64: 8, 8>}, {pipeline_mode = #tpu.pipeline_mode<synchronous>, transform_indices = @transform_2, window_bounds = array<i64: 16, 32>}, {pipeline_mode = #tpu.pipeline_mode<synchronous>, transform_indices = @transform_3, window_bounds = array<i64: 1, 32>}, {pipeline_mode = #tpu.pipeline_mode<synchronous>, transform_indices = @transform_4, window_bounds = array<i64: 32, 16>}, {pipeline_mode = #tpu.pipeline_mode<synchronous>, transform_indices = @transform_5, window_bounds = array<i64: 1, 16>}, {transform_indices = @transform_6, window_bounds = array<i64: 8, 8>}, {transform_indices = @transform_7, window_bounds = array<i64: 1, 1>}]} {
    %c0 = arith.constant 0 : index
    %c0_0 = arith.constant 0 : index
    %0 = vector.load %arg1[%c0, %c0_0] : memref<8x16xf32, #tpu.memory_space<vmem>>, vector<8x16xf32>
    %c0_1 = arith.constant 0 : index
    %c0_2 = arith.constant 0 : index
    %1 = vector.load %arg3[%c0_1, %c0_2] : memref<16x32xf32, #tpu.memory_space<vmem>>, vector<16x32xf32>
    %cst = arith.constant dense<0.000000e+00> : vector<8x32xf32>
    %2 = tpu.matmul %0, %1, %cst {dimension_numbers = #tpu.dot_dimension_numbers<[1], [0], [0], [1], [0, 0, 1, 1], [], []>} : vector<8x16xf32>, vector<16x32xf32>, vector<8x32xf32> -> vector<8x32xf32>
    %c0_3 = arith.constant 0 : index
    %c0_4 = arith.constant 0 : index
    %3 = vector.load %arg4[%c0_3, %c0_4] : memref<1x32xf32, #tpu.memory_space<vmem>>, vector<1x32xf32>
    %4 = vector.broadcast %3 : vector<1x32xf32> to vector<8x32xf32>
    %5 = arith.addf %2, %4 : vector<8x32xf32>
    %6 = math.tanh %5 : vector<8x32xf32>
    %c0_5 = arith.constant 0 : index
    %c0_6 = arith.constant 0 : index
    %7 = vector.load %arg5[%c0_5, %c0_6] : memref<32x16xf32, #tpu.memory_space<vmem>>, vector<32x16xf32>
    %cst_7 = arith.constant dense<0.000000e+00> : vector<8x16xf32>
    %8 = tpu.matmul %6, %7, %cst_7 {dimension_numbers = #tpu.dot_dimension_numbers<[1], [0], [0], [1], [0, 0, 1, 1], [], []>} : vector<8x32xf32>, vector<32x16xf32>, vector<8x16xf32> -> vector<8x16xf32>
    %c0_8 = arith.constant 0 : index
    %c0_9 = arith.constant 0 : index
    %9 = vector.load %arg6[%c0_8, %c0_9] : memref<1x16xf32, #tpu.memory_space<vmem>>, vector<1x16xf32>
    %10 = vector.broadcast %9 : vector<1x16xf32> to vector<8x16xf32>
    %11 = arith.addf %8, %10 : vector<8x16xf32>
    %12 = vector.extract_strided_slice %11 {offsets = [0, 0], sizes = [8, 8], strides = [1, 1]} : vector<8x16xf32> to vector<8x8xf32>
    %13 = math.tanh %12 : vector<8x8xf32>
    %14 = vector.extract_strided_slice %11 {offsets = [0, 8], sizes = [8, 8], strides = [1, 1]} : vector<8x16xf32> to vector<8x8xf32>
    %cst_10 = arith.constant -2.000000e+01 : f32
    %cst_11 = arith.constant 2.000000e+00 : f32
    %15 = vector.broadcast %cst_10 : f32 to vector<8x8xf32>
    %16 = arith.maximumf %15, %14 : vector<8x8xf32>
    %17 = vector.broadcast %cst_11 : f32 to vector<8x8xf32>
    %18 = arith.minimumf %17, %16 : vector<8x8xf32>
    %19 = math.exp %18 : vector<8x8xf32>
    %20 = math.tanh %19 : vector<8x8xf32>
    %c0_12 = arith.constant 0 : index
    %c0_13 = arith.constant 0 : index
    %21 = vector.load %arg2[%c0_12, %c0_13] : memref<8x8xf32, #tpu.memory_space<vmem>>, vector<8x8xf32>
    %22 = arith.mulf %20, %21 : vector<8x8xf32>
    %23 = arith.addf %13, %22 : vector<8x8xf32>
    %c0_14 = arith.constant 0 : index
    %c0_15 = arith.constant 0 : index
    %24 = vector.load %arg7[%c0_14, %c0_15] : memref<8x8xf32, #tpu.memory_space<vmem>>, vector<8x8xf32>
    tpu.vector_store %arg7[%c0_14, %c0_15], %23 {strides = array<i32>} : memref<8x8xf32, #tpu.memory_space<vmem>>, vector<8x8xf32>,
    %25 = arith.mulf %21, %21 : vector<8x8xf32>
    %cst_16 = arith.constant -5.000000e-01 : f32
    %26 = vector.broadcast %cst_16 : f32 to vector<8x8xf32>
    %27 = arith.mulf %26, %25 : vector<8x8xf32>
    %28 = math.log %20 : vector<8x8xf32>
    %29 = arith.subf %27, %28 : vector<8x8xf32>
    %cst_17 = arith.constant 0.918938517 : f32
    %30 = vector.broadcast %cst_17 : f32 to vector<8x8xf32>
    %31 = arith.subf %29, %30 : vector<8x8xf32>
    %cst_18 = arith.constant dense<0.000000e+00> : vector<8xf32>
    %32 = vector.multi_reduction <add>, %31, %cst_18 [1] : vector<8x8xf32> to vector<8xf32>
    %33 = vector.shape_cast %32 : vector<8xf32> to vector<8x1xf32>
    %cst_19 = arith.constant dense<0.000000e+00> : vector<1xf32>
    %34 = vector.multi_reduction <add>, %33, %cst_19 [0] : vector<8x1xf32> to vector<1xf32>
    %35 = vector.shape_cast %34 : vector<1xf32> to vector<1x1xf32>
    %c0_20 = arith.constant 0 : index
    %c0_21 = arith.constant 0 : index
    %36 = vector.load %arg8[%c0_20, %c0_21] : memref<1x1xf32, #tpu.memory_space<vmem>>, vector<1x1xf32>
    tpu.vector_store %arg8[%c0_20, %c0_21], %35 {strides = array<i32>} : memref<1x1xf32, #tpu.memory_space<vmem>>, vector<1x1xf32>,
    return
  }
  func.func @transform_0(%arg0: i32) -> (i32, i32) {
    %c0_i32 = arith.constant 0 : i32
    %c0_i32_0 = arith.constant 0 : i32
    return %arg0, %c0_i32 : i32, i32
  }
  func.func @transform_1(%arg0: i32) -> (i32, i32) {
    %c0_i32 = arith.constant 0 : i32
    %c0_i32_0 = arith.constant 0 : i32
    return %arg0, %c0_i32 : i32, i32
  }
  func.func @transform_2(%arg0: i32) -> (i32, i32) {
    %c0_i32 = arith.constant 0 : i32
    %c0_i32_0 = arith.constant 0 : i32
    %c0_i32_1 = arith.constant 0 : i32
    return %c0_i32, %c0_i32_0 : i32, i32
  }
  func.func @transform_3(%arg0: i32) -> (i32, i32) {
    %c0_i32 = arith.constant 0 : i32
    %c0_i32_0 = arith.constant 0 : i32
    %c0_i32_1 = arith.constant 0 : i32
    return %c0_i32, %c0_i32_0 : i32, i32
  }
  func.func @transform_4(%arg0: i32) -> (i32, i32) {
    %c0_i32 = arith.constant 0 : i32
    %c0_i32_0 = arith.constant 0 : i32
    %c0_i32_1 = arith.constant 0 : i32
    return %c0_i32, %c0_i32_0 : i32, i32
  }
  func.func @transform_5(%arg0: i32) -> (i32, i32) {
    %c0_i32 = arith.constant 0 : i32
    %c0_i32_0 = arith.constant 0 : i32
    %c0_i32_1 = arith.constant 0 : i32
    return %c0_i32, %c0_i32_0 : i32, i32
  }
  func.func @transform_6(%arg0: i32) -> (i32, i32) {
    %c0_i32 = arith.constant 0 : i32
    %c0_i32_0 = arith.constant 0 : i32
    return %arg0, %c0_i32 : i32, i32
  }
  func.func @transform_7(%arg0: i32) -> (i32, i32) {
    %c0_i32 = arith.constant 0 : i32
    %c0_i32_0 = arith.constant 0 : i32
    return %arg0, %c0_i32 : i32, i32
  }
}

</mosaic_0001>

<llo_original>
// kernel: tpu_custom_call.1
$region0: #{tpu_custom_call.1}
  #allocation0 [shape = 'u32[]', space=smem, size = 0x4, offset = 0x4, fixed_abs, tag = 'smem constant byte address 0x4 - core index']
  #allocation1 [shape = 'u32[144,128]{1,0:T(1,128)}', space=vmem, size = 0x12000, scoped, tag = 'internal scratch']
  %s0 = inlined_call_operand.vmem [shape: f32[8,16], index: 0, kind: input, shape index: {}]
  %s1 = inlined_call_operand.vmem [shape: f32[8,8], index: 1, kind: input, shape index: {}]
  %s2 = inlined_call_operand.vmem [shape: f32[16,32], index: 2, kind: input, shape index: {}]
  %s3 = inlined_call_operand.vmem [shape: f32[1,32], index: 3, kind: input, shape index: {}]
  %s4 = inlined_call_operand.vmem [shape: f32[32,16], index: 4, kind: input, shape index: {}]
  %s5 = inlined_call_operand.vmem [shape: f32[1,16], index: 5, kind: input, shape index: {}]
  %s6 = inlined_call_operand.hbm [shape: f32[8,8], index: 6, kind: output, shape index: {0}]
  %s7 = inlined_call_operand.hbm [shape: f32[1,1], index: 7, kind: output, shape index: {1}]
  %8 = xla_tuple %s6, %s7
  %s9 = sld [smem:[#allocation0]]
  $region42: #{tpu_custom_call.1} parent=0
    _
  %s11 = ssub.s32 1, %s9
  %s12 = scalar_select 0, %s11, %s9
  $region1: #{tpu_custom_call.1} parent=0
    #allocation2 [shape = 'u8[4096]{0}', space=vmem, size = 0x1000, scoped, tag = 'output window, operand 0, single buffered']
    #allocation3 [shape = 's32[1]{0}', space=sflag, size = 0x4, scoped, tag = 'scoped memory for tpu_custom_call.1']
    #allocation4 [shape = 'u8[512]{0}', space=vmem, size = 0x400, scoped, tag = 'output window, operand 1, single buffered']
    #allocation5 [shape = 's32[1]{0}', space=sflag, size = 0x4, scoped, tag = 'scoped memory for tpu_custom_call.1']
    %13 = vsyncpa [#allocation3], 0
    %14 = vsyncpa [#allocation5], 0
    // Predicated region
    $region2: #{tpu_custom_call.1} parent=1 // pred_check
      _
    $region3: #{tpu_custom_call.1} parent=1 // pred_check_branch
      %16 = sbr.rel (0) target = $region5
    $region4: #{tpu_custom_call.1} parent=1 // pred_region
      _
    $region5: #{tpu_custom_call.1} parent=1 // pred_fallthru
      _
    // Predicated region
    $region6: #{tpu_custom_call.1} parent=1 // pred_check
      _
    $region7: #{tpu_custom_call.1} parent=1 // pred_check_branch
      %18 = sbr.rel (0) target = $region9
    $region8: #{tpu_custom_call.1} parent=1 // pred_region
      _
    $region9: #{tpu_custom_call.1} parent=1 // pred_fallthru
      _
    // Predicated region
    $region10: #{tpu_custom_call.1} parent=1 // pred_check
      _
    $region11: #{tpu_custom_call.1} parent=1 // pred_check_branch
      %20 = sbr.rel (0) target = $region13
    $region12: #{tpu_custom_call.1} parent=1 // pred_region
      _
    $region13: #{tpu_custom_call.1} parent=1 // pred_fallthru
      _
    // Predicated region
    $region14: #{tpu_custom_call.1} parent=1 // pred_check
      _
    $region15: #{tpu_custom_call.1} parent=1 // pred_check_branch
      %22 = sbr.rel (0) target = $region17
    $region16: #{tpu_custom_call.1} parent=1 // pred_region
      _
    $region17: #{tpu_custom_call.1} parent=1 // pred_fallthru
      _
    // Predicated region
    $region18: #{tpu_custom_call.1} parent=1 // pred_check
      _
    $region19: #{tpu_custom_call.1} parent=1 // pred_check_branch
      %24 = sbr.rel (0) target = $region21
    $region20: #{tpu_custom_call.1} parent=1 // pred_region
      _
    $region21: #{tpu_custom_call.1} parent=1 // pred_fallthru
      _
    // Predicated region
    $region22: #{tpu_custom_call.1} parent=1 // pred_check
      _
    $region23: #{tpu_custom_call.1} parent=1 // pred_check_branch
      %26 = sbr.rel (0) target = $region25
    $region24: #{tpu_custom_call.1} parent=1 // pred_region
      _
    $region25: #{tpu_custom_call.1} parent=1 // pred_fallthru
      _
    %v27 = vld [vmem:[%s0] sm:$0xff]
    %v28 = vld [vmem:[%s2] sm:$0xff]
    %v29 = vld [vmem:[%s2 + $0x8] sm:$0xff]
    %v30 = vld [vmem:[%s3] sm:$0x1]
    %v32 = vlaneseq
    %v33 = vshrl.u32 %v32, 7
    %v34 = vsub.s32 0, %v33
    %v35 = vrot.slane %v30, %v34
    %vm37 = vcmask 130048
    %v39 = vsel %vm37, %v27, 0
    %41 = vmatprep.subr.mxu0 0.0
    %42 = vmatpush1.msra.mxu0 0.0
    %43 = vmatprep.subr.mxu0 0.0
    %44 = vmatpush1.msra.mxu0 0.0
    %45 = vmatprep.subr.mxu0 0.0
    %46 = vmatpush1.msra.mxu0 0.0
    %47 = vmatprep.subr.mxu0 0.0
    %48 = vmatpush1.msra.mxu0 0.0
    %49 = vmatprep.subr.mxu0 0.0
    %50 = vmatpush1.msra.mxu0 0.0
    %51 = vmatprep.subr.mxu0 0.0
    %52 = vmatpush1.msra.mxu0 0.0
    %53 = vmatprep.subr.mxu0 0.0
    %54 = vmatpush1.msra.mxu0 0.0
    %55 = vmatprep.subr.mxu0 0.0
    %56 = vmatpush1.msra.mxu0 0.0
    %57 = vmatprep.subr.mxu0 0.0
    %58 = vmatpush1.msra.mxu0 0.0
    %59 = vmatprep.subr.mxu0 0.0
    %60 = vmatpush1.msra.mxu0 0.0
    %61 = vmatprep.subr.mxu0 0.0
    %62 = vmatpush1.msra.mxu0 0.0
    %63 = vmatprep.subr.mxu0 0.0
    %64 = vmatpush1.msra.mxu0 0.0
    %65 = vmatprep.subr.mxu0 0.0
    %66 = vmatpush1.msra.mxu0 0.0
    %67 = vmatprep.subr.mxu0 0.0
    %68 = vmatpush1.msra.mxu0 0.0
    %69 = vmatprep.subr.mxu0 0.0
    %70 = vmatpush1.msra.mxu0 %v29
    %71 = vmatprep.subr.mxu0 0.0
    %72 = vmatpush1.msra.mxu0 %v28
    %73 = vmatprep.subr.mxu0 0.0
    %74 = vmatpush2.msra.mxu0 0.0
    %75 = vmatprep.subr.mxu0 0.0
    %76 = vmatpush2.msra.mxu0 0.0
    %77 = vmatprep.subr.mxu0 0.0
    %78 = vmatpush2.msra.mxu0 0.0
    %79 = vmatprep.subr.mxu0 0.0
    %80 = vmatpush2.msra.mxu0 0.0
    %81 = vmatprep.subr.mxu0 0.0
    %82 = vmatpush2.msra.mxu0 0.0
    %83 = vmatprep.subr.mxu0 0.0
    %84 = vmatpush2.msra.mxu0 0.0
    %85 = vmatprep.subr.mxu0 0.0
    %86 = vmatpush2.msra.mxu0 0.0
    %87 = vmatprep.subr.mxu0 0.0
    %88 = vmatpush2.msra.mxu0 0.0
    %89 = vmatprep.subr.mxu0 0.0
    %90 = vmatpush2.msra.mxu0 0.0
    %91 = vmatprep.subr.mxu0 0.0
    %92 = vmatpush2.msra.mxu0 0.0
    %93 = vmatprep.subr.mxu0 0.0
    %94 = vmatpush2.msra.mxu0 0.0
    %95 = vmatprep.subr.mxu0 0.0
    %96 = vmatpush2.msra.mxu0 0.0
    %97 = vmatprep.subr.mxu0 0.0
    %98 = vmatpush2.msra.mxu0 0.0
    %99 = vmatprep.subr.mxu0 0.0
    %100 = vmatpush2.msra.mxu0 0.0
    %101 = vmatprep.subr.mxu0 0.0
    %102 = vmatpush2.msra.mxu0 0.0
    %103 = vmatprep.subr.mxu0 0.0
    %104 = vmatpush2.msra.mxu0 0.0
    %105 = vmatprep.mubr.f32.mxu0 0.0
    %106 = vmatmul.mubr.f32.gmra.mxu0 %v39
    %v107 = vpop.f32.mrf.mxu0
    %v108 = vadd.f32 %v35, %v107
    %v109 = vpop.f32.mrf.mxu0
    %110 = vdwg.mxu0
    %v111 = vtanh.pop %v108
    %v112 = vld [vmem:[%s4] sm:$0xff]
    %v113 = vld [vmem:[%s4 + $0x8] sm:$0xff]
    %v114 = vld [vmem:[%s4 + $0x10] sm:$0xff]
    %v115 = vld [vmem:[%s4 + $0x18] sm:$0xff]
    %v116 = vld [vmem:[%s5] sm:$0x1]
    %v118 = vlaneseq
    %v119 = vshrl.u32 %v118, 7
    %v120 = vsub.s32 0, %v119
    %v121 = vrot.slane %v116, %v120
    %vm123 = vcmask 261120
    %v125 = vsel %vm123, %v111, 0
    %127 = vmatprep.subr.mxu0 0.0
    %128 = vmatpush1.msra.mxu0 0.0
    %129 = vmatprep.subr.mxu0 0.0
    %130 = vmatpush1.msra.mxu0 0.0
    %131 = vmatprep.subr.mxu0 0.0
    %132 = vmatpush1.msra.mxu0 0.0
    %133 = vmatprep.subr.mxu0 0.0
    %134 = vmatpush1.msra.mxu0 0.0
    %135 = vmatprep.subr.mxu0 0.0
    %136 = vmatpush1.msra.mxu0 0.0
    %137 = vmatprep.subr.mxu0 0.0
    %138 = vmatpush1.msra.mxu0 0.0
    %139 = vmatprep.subr.mxu0 0.0
    %140 = vmatpush1.msra.mxu0 0.0
    %141 = vmatprep.subr.mxu0 0.0
    %142 = vmatpush1.msra.mxu0 0.0
    %143 = vmatprep.subr.mxu0 0.0
    %144 = vmatpush1.msra.mxu0 0.0
    %145 = vmatprep.subr.mxu0 0.0
    %146 = vmatpush1.msra.mxu0 0.0
    %147 = vmatprep.subr.mxu0 0.0
    %148 = vmatpush1.msra.mxu0 0.0
    %149 = vmatprep.subr.mxu0 0.0
    %150 = vmatpush1.msra.mxu0 0.0
    %151 = vmatprep.subr.mxu0 0.0
    %152 = vmatpush1.msra.mxu0 %v115
    %153 = vmatprep.subr.mxu0 0.0
    %154 = vmatpush1.msra.mxu0 %v114
    %155 = vmatprep.subr.mxu0 0.0
    %156 = vmatpush1.msra.mxu0 %v113
    %157 = vmatprep.subr.mxu0 0.0
    %158 = vmatpush1.msra.mxu0 %v112
    %159 = vmatprep.subr.mxu0 0.0
    %160 = vmatpush2.msra.mxu0 0.0
    %161 = vmatprep.subr.mxu0 0.0
    %162 = vmatpush2.msra.mxu0 0.0
    %163 = vmatprep.subr.mxu0 0.0
    %164 = vmatpush2.msra.mxu0 0.0
    %165 = vmatprep.subr.mxu0 0.0
    %166 = vmatpush2.msra.mxu0 0.0
    %167 = vmatprep.subr.mxu0 0.0
    %168 = vmatpush2.msra.mxu0 0.0
    %169 = vmatprep.subr.mxu0 0.0
    %170 = vmatpush2.msra.mxu0 0.0
    %171 = vmatprep.subr.mxu0 0.0
    %172 = vmatpush2.msra.mxu0 0.0
    %173 = vmatprep.subr.mxu0 0.0
    %174 = vmatpush2.msra.mxu0 0.0
    %175 = vmatprep.subr.mxu0 0.0
    %176 = vmatpush2.msra.mxu0 0.0
    %177 = vmatprep.subr.mxu0 0.0
    %178 = vmatpush2.msra.mxu0 0.0
    %179 = vmatprep.subr.mxu0 0.0
    %180 = vmatpush2.msra.mxu0 0.0
    %181 = vmatprep.subr.mxu0 0.0
    %182 = vmatpush2.msra.mxu0 0.0
    %183 = vmatprep.subr.mxu0 0.0
    %184 = vmatpush2.msra.mxu0 0.0
    %185 = vmatprep.subr.mxu0 0.0
    %186 = vmatpush2.msra.mxu0 0.0
    %187 = vmatprep.subr.mxu0 0.0
    %188 = vmatpush2.msra.mxu0 0.0
    %189 = vmatprep.subr.mxu0 0.0
    %190 = vmatpush2.msra.mxu0 0.0
    %191 = vmatprep.mubr.f32.mxu0 0.0
    %192 = vmatmul.mubr.f32.gmra.mxu0 %v125
    %v193 = vpop.f32.mrf.mxu0
    %v194 = vadd.f32 %v121, %v193
    %v195 = vpop.f32.mrf.mxu0
    %196 = vdwg.mxu0
    %v197 = vtanh.pop %v194
    %v198 = vmax.f32 %v194, -20.0
    %v199 = vmin.f32 %v198, 2.0
    %v200 = vmul.f32 %v199, 1.442695
    %v201 = vpow.pop %v200
    %v202 = vtanh.pop %v201
    %v203 = vld [vmem:[%s1] sm:$0xff]
    %205 = vrot.lane.b32.xlu0 %v203, 8
    %v206 = vpop.permute.xlu0 %205
    %v208 = vmul.f32 %v202, %v206
    %210 = vrot.lane.b32.xlu0 %v208, 120
    %v211 = vpop.permute.xlu0 %210
    %v213 = vadd.f32 %v197, %v211
    %vm214 = vcmask 64512
    %215 = vst.msk [vmem:[#allocation2] sm:$0xff] %vm214, %v213
    %v216 = vmul.f32 %v203, %v203
    %v217 = vmul.f32 %v216, -0.5
    %v218 = vlog2.pop %v202
    %v219 = vmul.f32 %v218, 0.6931472
    %221 = vrot.lane.b32.xlu0 %v219, 120
    %v222 = vpop.permute.xlu0 %221
    %v224 = vsub.f32 %v217, %v222
    %v225 = vsub.f32 %v224, 0.9189385
    %v226 = vsel %vm214, %v225, 0.0
    %227 = vadd.xlane.f32.xlu0 %v226
    %v228 = vpop.xlane.xlu0 %227
    %v229 = vrot.slane %v228, 4
    %v230 = vadd.f32 %v228, %v229
    %v231 = vrot.slane %v230, 2
    %v232 = vadd.f32 %v230, %v231
    %v233 = vrot.slane %v232, 1
    %v234 = vadd.f32 %v232, %v233
    %vm235 = vcmask 0
    %236 = vst.msk [vmem:[#allocation4] sm:$0x1] %vm235, %v234
    // Predicated region
    $region26: #{tpu_custom_call.1} parent=1 // pred_check
      _
    $region27: #{tpu_custom_call.1} parent=1 // pred_check_branch
      %238 = sbr.rel (0) target = $region29
    $region28: #{tpu_custom_call.1} parent=1 // pred_region
      %s240 = ssub.s32 128, 128
      %241 = vsyncadd [#allocation3], %s240
      %s243 = sshll.u32 [#allocation2], 4
      %s244 = int_to_ptr.vmem [resolvable:$true] %s243
      %246 = dma.vmem_to_hbm [thread:$0]  %s244, 128, %s6, [#allocation3]
    $region29: #{tpu_custom_call.1} parent=1 // pred_fallthru
      _
    // Predicated region
    $region30: #{tpu_custom_call.1} parent=1 // pred_check
      _
    $region31: #{tpu_custom_call.1} parent=1 // pred_check_branch
      %248 = sbr.rel (0) target = $region33
    $region32: #{tpu_custom_call.1} parent=1 // pred_region
      %s250 = ssub.s32 16, 16
      %251 = vsyncadd [#allocation5], %s250
      %s253 = sshll.u32 [#allocation4], 4
      %s254 = int_to_ptr.vmem [resolvable:$true] %s253
      %256 = dma.vmem_to_hbm [thread:$0]  %s254, 16, %s7, [#allocation5]
    $region33: #{tpu_custom_call.1} parent=1 // pred_fallthru
      _
    // Predicated region
    $region34: #{tpu_custom_call.1} parent=1 // pred_check
      _
    $region35: #{tpu_custom_call.1} parent=1 // pred_check_branch
      %258 = sbr.rel (0) target = $region37
    $region36: #{tpu_custom_call.1} parent=1 // pred_region
      %259 = dma.done [#allocation3], 128
    $region37: #{tpu_custom_call.1} parent=1 // pred_fallthru
      _
    // Predicated region
    $region38: #{tpu_custom_call.1} parent=1 // pred_check
      _
    $region39: #{tpu_custom_call.1} parent=1 // pred_check_branch
      %261 = sbr.rel (0) target = $region41
    $region40: #{tpu_custom_call.1} parent=1 // pred_region
      %262 = dma.done [#allocation5], 16
    $region41: #{tpu_custom_call.1} parent=1 // pred_fallthru
      _
    %263 = vsyncpa [#allocation3], 1
    %264 = vsyncpa [#allocation5], 1

</llo_original>
